<compile_context>
chip_gen: v5e
topology: v5e:2x2
jax: 0.10.0
libtpu: 0.0.40
codegen_flags: <defaults>
</compile_context>

<pallas_src>
import jax
import jax.numpy as jnp
from jax.experimental import pallas as pl
from jax.experimental.pallas import tpu as pltpu

_NUM_ITERS = 10
_CHANNEL = 1  # PyTorch: input[:, 1:2]

# Conservative: fits the default scoped-VMEM limit on v5e/v6e/v7x.
_VMEM_BUDGET_BYTES = 16 * 1024 * 1024


def _tent_chain(z):
    """Apply the tent map 10x, returning every iterate (all stay in vregs)."""
    zs = []
    for _ in range(_NUM_ITERS):
        # Exactly matches torch.where(z < 0.5, 2*z, 2 - 2*z) in f32.
        z = jnp.where(z < 0.5, 2.0 * z, 2.0 - 2.0 * z)
        zs.append(z)
    return zs


def tent_kernel_fused(z_ref, o_ref):
    """Single-block path.  z_ref: (B, N) f32; o_ref: (B, 10*N) f32 (lane-dense)."""
    zs = _tent_chain(z_ref[...])
    # Lane-axis concat: chunks start on 128-lane boundaries when N % 128 == 0,
    # so this lowers to one unmasked bulk store (no per-iterate vst.msk).
    o_ref[...] = jnp.concatenate(zs, axis=-1)


def tent_kernel_tiled(z_ref, o_ref):
    """Tiled path (large inputs).  z_ref: (B, TILE_N); o_ref: (B, 10, TILE_N)."""
    zs = _tent_chain(z_ref[...])
    # Per-iterate stores are lane-dense (TILE_N is a multiple of 128); at the
    # sizes this path is taken, the kernel is HBM-writeback-bound so the
    # sublane-masking on the middle axis is not the binding slot.
    for ix, z in enumerate(zs):
        o_ref[:, ix, :] = z


def _double_buffered_bytes(batch, n):
    # (1 input + 10 output) f32 blocks, double-buffered by the pipeline.
    return 2 * (1 + _NUM_ITERS) * batch * n * 4


def perfect_model_forward(x):
    """x: (B, C, H, W) float32 (NCHW, as in PyTorch).  Returns (B, 10, H, W)."""
    B, C, H, W = x.shape
    N = H * W
    # Free, layout-preserving view: channel c occupies columns [c*N, (c+1)*N).
    x_flat = x.reshape(B, C * N)

    small = _double_buffered_bytes(B, N) <= _VMEM_BUDGET_BYTES

    if small or (N % 128 != 0):
        # Single-block path: whole problem in one grid step, one bulk store.
        out = pl.pallas_call(
            tent_kernel_fused,
            out_shape=jax.ShapeDtypeStruct((B, _NUM_ITERS * N), jnp.float32),
            grid=(1,),
            # Block index 1 along the flattened C*N axis == the channel-1 slab;
            # the channel select rides on the input DMA, no separate slice op.
            in_specs=[pl.BlockSpec((B, N), lambda i: (0, _CHANNEL))],
            out_specs=pl.BlockSpec((B, _NUM_ITERS * N), lambda i: (0, 0)),
            compiler_params=pltpu.CompilerParams(
                dimension_semantics=("parallel",)),
        )(x_flat)
        return out.reshape(B, _NUM_ITERS, H, W)

    # Tiled path for real workload sizes: split the spatial axis across a
    # 'parallel' grid (megacore / 2-TC sharding on v7x), keeping blocks under
    # the VMEM budget (output blocks are 10x the input block, double-buffered).
    tile_n = N
    while (_double_buffered_bytes(B, tile_n) > _VMEM_BUDGET_BYTES
           and tile_n % 2 == 0 and (tile_n // 2) % 128 == 0):
        tile_n //= 2
    blocks_per_channel = N // tile_n

    out = pl.pallas_call(
        tent_kernel_tiled,
        out_shape=jax.ShapeDtypeStruct((B, _NUM_ITERS, N), jnp.float32),
        grid=(blocks_per_channel,),
        in_specs=[pl.BlockSpec(
            (B, tile_n),
            lambda j: (0, _CHANNEL * blocks_per_channel + j))],
        out_specs=pl.BlockSpec((B, _NUM_ITERS, tile_n), lambda j: (0, 0, j)),
        compiler_params=pltpu.CompilerParams(
            dimension_semantics=("parallel",)),
    )(x_flat)
    return out.reshape(B, _NUM_ITERS, H, W)


def reference_forward(x):
    z = x[:, 1:2]
    result = []
    for _ in range(_NUM_ITERS):
        z = jnp.where(z < 0.5, 2.0 * z, 2.0 - 2.0 * z)
        result.append(z)
    return jnp.concatenate(result, axis=1)


if __name__ == "__main__":
    key = jax.random.PRNGKey(0)
    # Small shapes consistent with the forward: batch=2, channels=4, spatial=16.
    x = jax.random.uniform(key, (2, 4, 16, 16), dtype=jnp.float32)

    y = jax.jit(perfect_model_forward)(x)
    jax.block_until_ready(y)

    y_ref = reference_forward(x)
    assert y.shape == (2, 10, 16, 16), y.shape
    assert jnp.allclose(y, y_ref, atol=1e-6), "mismatch vs reference"

    print("KERNEL_OK")
</pallas_src>

<mosaic_0001>
module attributes {stable_mosaic.version = 11 : i64} {
  func.func @tent_kernel_fused(%arg0: i32, %arg1: memref<2x256xf32, #tpu.memory_space<vmem>>, %arg2: memref<2x2560xf32, #tpu.memory_space<vmem>>) attributes {dimension_semantics = [#tpu.dimension_semantics<parallel>], iteration_bounds = array<i64: 1>, scalar_prefetch = 0 : i64, scratch_operands = 0 : i64, tpu.core_type = #tpu.core_type<tc>, window_params = [{transform_indices = @transform_0, window_bounds = array<i64: 2, 256>}, {pipeline_mode = #tpu.pipeline_mode<synchronous>, transform_indices = @transform_1, window_bounds = array<i64: 2, 2560>}]} {
    %c0 = arith.constant 0 : index
    %c0_0 = arith.constant 0 : index
    %0 = vector.load %arg1[%c0, %c0_0] : memref<2x256xf32, #tpu.memory_space<vmem>>, vector<2x256xf32>
    %cst = arith.constant 5.000000e-01 : f32
    %1 = vector.broadcast %cst : f32 to vector<2x256xf32>
    %2 = arith.cmpf olt, %0, %1 : vector<2x256xf32>
    %cst_1 = arith.constant 2.000000e+00 : f32
    %3 = vector.broadcast %cst_1 : f32 to vector<2x256xf32>
    %4 = arith.mulf %3, %0 : vector<2x256xf32>
    %cst_2 = arith.constant 2.000000e+00 : f32
    %5 = vector.broadcast %cst_2 : f32 to vector<2x256xf32>
    %6 = arith.mulf %5, %0 : vector<2x256xf32>
    %cst_3 = arith.constant 2.000000e+00 : f32
    %7 = vector.broadcast %cst_3 : f32 to vector<2x256xf32>
    %8 = arith.subf %7, %6 : vector<2x256xf32>
    %9 = arith.select %2, %4, %8 : vector<2x256xi1>, vector<2x256xf32>
    %cst_4 = arith.constant 5.000000e-01 : f32
    %10 = vector.broadcast %cst_4 : f32 to vector<2x256xf32>
    %11 = arith.cmpf olt, %9, %10 : vector<2x256xf32>
    %cst_5 = arith.constant 2.000000e+00 : f32
    %12 = vector.broadcast %cst_5 : f32 to vector<2x256xf32>
    %13 = arith.mulf %12, %9 : vector<2x256xf32>
    %cst_6 = arith.constant 2.000000e+00 : f32
    %14 = vector.broadcast %cst_6 : f32 to vector<2x256xf32>
    %15 = arith.mulf %14, %9 : vector<2x256xf32>
    %cst_7 = arith.constant 2.000000e+00 : f32
    %16 = vector.broadcast %cst_7 : f32 to vector<2x256xf32>
    %17 = arith.subf %16, %15 : vector<2x256xf32>
    %18 = arith.select %11, %13, %17 : vector<2x256xi1>, vector<2x256xf32>
    %cst_8 = arith.constant 5.000000e-01 : f32
    %19 = vector.broadcast %cst_8 : f32 to vector<2x256xf32>
    %20 = arith.cmpf olt, %18, %19 : vector<2x256xf32>
    %cst_9 = arith.constant 2.000000e+00 : f32
    %21 = vector.broadcast %cst_9 : f32 to vector<2x256xf32>
    %22 = arith.mulf %21, %18 : vector<2x256xf32>
    %cst_10 = arith.constant 2.000000e+00 : f32
    %23 = vector.broadcast %cst_10 : f32 to vector<2x256xf32>
    %24 = arith.mulf %23, %18 : vector<2x256xf32>
    %cst_11 = arith.constant 2.000000e+00 : f32
    %25 = vector.broadcast %cst_11 : f32 to vector<2x256xf32>
    %26 = arith.subf %25, %24 : vector<2x256xf32>
    %27 = arith.select %20, %22, %26 : vector<2x256xi1>, vector<2x256xf32>
    %cst_12 = arith.constant 5.000000e-01 : f32
    %28 = vector.broadcast %cst_12 : f32 to vector<2x256xf32>
    %29 = arith.cmpf olt, %27, %28 : vector<2x256xf32>
    %cst_13 = arith.constant 2.000000e+00 : f32
    %30 = vector.broadcast %cst_13 : f32 to vector<2x256xf32>
    %31 = arith.mulf %30, %27 : vector<2x256xf32>
    %cst_14 = arith.constant 2.000000e+00 : f32
    %32 = vector.broadcast %cst_14 : f32 to vector<2x256xf32>
    %33 = arith.mulf %32, %27 : vector<2x256xf32>
    %cst_15 = arith.constant 2.000000e+00 : f32
    %34 = vector.broadcast %cst_15 : f32 to vector<2x256xf32>
    %35 = arith.subf %34, %33 : vector<2x256xf32>
    %36 = arith.select %29, %31, %35 : vector<2x256xi1>, vector<2x256xf32>
    %cst_16 = arith.constant 5.000000e-01 : f32
    %37 = vector.broadcast %cst_16 : f32 to vector<2x256xf32>
    %38 = arith.cmpf olt, %36, %37 : vector<2x256xf32>
    %cst_17 = arith.constant 2.000000e+00 : f32
    %39 = vector.broadcast %cst_17 : f32 to vector<2x256xf32>
    %40 = arith.mulf %39, %36 : vector<2x256xf32>
    %cst_18 = arith.constant 2.000000e+00 : f32
    %41 = vector.broadcast %cst_18 : f32 to vector<2x256xf32>
    %42 = arith.mulf %41, %36 : vector<2x256xf32>
    %cst_19 = arith.constant 2.000000e+00 : f32
    %43 = vector.broadcast %cst_19 : f32 to vector<2x256xf32>
    %44 = arith.subf %43, %42 : vector<2x256xf32>
    %45 = arith.select %38, %40, %44 : vector<2x256xi1>, vector<2x256xf32>
    %cst_20 = arith.constant 5.000000e-01 : f32
    %46 = vector.broadcast %cst_20 : f32 to vector<2x256xf32>
    %47 = arith.cmpf olt, %45, %46 : vector<2x256xf32>
    %cst_21 = arith.constant 2.000000e+00 : f32
    %48 = vector.broadcast %cst_21 : f32 to vector<2x256xf32>
    %49 = arith.mulf %48, %45 : vector<2x256xf32>
    %cst_22 = arith.constant 2.000000e+00 : f32
    %50 = vector.broadcast %cst_22 : f32 to vector<2x256xf32>
    %51 = arith.mulf %50, %45 : vector<2x256xf32>
    %cst_23 = arith.constant 2.000000e+00 : f32
    %52 = vector.broadcast %cst_23 : f32 to vector<2x256xf32>
    %53 = arith.subf %52, %51 : vector<2x256xf32>
    %54 = arith.select %47, %49, %53 : vector<2x256xi1>, vector<2x256xf32>
    %cst_24 = arith.constant 5.000000e-01 : f32
    %55 = vector.broadcast %cst_24 : f32 to vector<2x256xf32>
    %56 = arith.cmpf olt, %54, %55 : vector<2x256xf32>
    %cst_25 = arith.constant 2.000000e+00 : f32
    %57 = vector.broadcast %cst_25 : f32 to vector<2x256xf32>
    %58 = arith.mulf %57, %54 : vector<2x256xf32>
    %cst_26 = arith.constant 2.000000e+00 : f32
    %59 = vector.broadcast %cst_26 : f32 to vector<2x256xf32>
    %60 = arith.mulf %59, %54 : vector<2x256xf32>
    %cst_27 = arith.constant 2.000000e+00 : f32
    %61 = vector.broadcast %cst_27 : f32 to vector<2x256xf32>
    %62 = arith.subf %61, %60 : vector<2x256xf32>
    %63 = arith.select %56, %58, %62 : vector<2x256xi1>, vector<2x256xf32>
    %cst_28 = arith.constant 5.000000e-01 : f32
    %64 = vector.broadcast %cst_28 : f32 to vector<2x256xf32>
    %65 = arith.cmpf olt, %63, %64 : vector<2x256xf32>
    %cst_29 = arith.constant 2.000000e+00 : f32
    %66 = vector.broadcast %cst_29 : f32 to vector<2x256xf32>
    %67 = arith.mulf %66, %63 : vector<2x256xf32>
    %cst_30 = arith.constant 2.000000e+00 : f32
    %68 = vector.broadcast %cst_30 : f32 to vector<2x256xf32>
    %69 = arith.mulf %68, %63 : vector<2x256xf32>
    %cst_31 = arith.constant 2.000000e+00 : f32
    %70 = vector.broadcast %cst_31 : f32 to vector<2x256xf32>
    %71 = arith.subf %70, %69 : vector<2x256xf32>
    %72 = arith.select %65, %67, %71 : vector<2x256xi1>, vector<2x256xf32>
    %cst_32 = arith.constant 5.000000e-01 : f32
    %73 = vector.broadcast %cst_32 : f32 to vector<2x256xf32>
    %74 = arith.cmpf olt, %72, %73 : vector<2x256xf32>
    %cst_33 = arith.constant 2.000000e+00 : f32
    %75 = vector.broadcast %cst_33 : f32 to vector<2x256xf32>
    %76 = arith.mulf %75, %72 : vector<2x256xf32>
    %cst_34 = arith.constant 2.000000e+00 : f32
    %77 = vector.broadcast %cst_34 : f32 to vector<2x256xf32>
    %78 = arith.mulf %77, %72 : vector<2x256xf32>
    %cst_35 = arith.constant 2.000000e+00 : f32
    %79 = vector.broadcast %cst_35 : f32 to vector<2x256xf32>
    %80 = arith.subf %79, %78 : vector<2x256xf32>
    %81 = arith.select %74, %76, %80 : vector<2x256xi1>, vector<2x256xf32>
    %cst_36 = arith.constant 5.000000e-01 : f32
    %82 = vector.broadcast %cst_36 : f32 to vector<2x256xf32>
    %83 = arith.cmpf olt, %81, %82 : vector<2x256xf32>
    %cst_37 = arith.constant 2.000000e+00 : f32
    %84 = vector.broadcast %cst_37 : f32 to vector<2x256xf32>
    %85 = arith.mulf %84, %81 : vector<2x256xf32>
    %cst_38 = arith.constant 2.000000e+00 : f32
    %86 = vector.broadcast %cst_38 : f32 to vector<2x256xf32>
    %87 = arith.mulf %86, %81 : vector<2x256xf32>
    %cst_39 = arith.constant 2.000000e+00 : f32
    %88 = vector.broadcast %cst_39 : f32 to vector<2x256xf32>
    %89 = arith.subf %88, %87 : vector<2x256xf32>
    %90 = arith.select %83, %85, %89 : vector<2x256xi1>, vector<2x256xf32>
    %91 = tpu.concatenate %9, %18, %27, %36, %45, %54, %63, %72, %81, %90 in 1 : vector<2x256xf32>, vector<2x256xf32>, vector<2x256xf32>, vector<2x256xf32>, vector<2x256xf32>, vector<2x256xf32>, vector<2x256xf32>, vector<2x256xf32>, vector<2x256xf32>, vector<2x256xf32> -> vector<2x2560xf32>
    %c0_40 = arith.constant 0 : index
    %c0_41 = arith.constant 0 : index
    %92 = vector.load %arg2[%c0_40, %c0_41] : memref<2x2560xf32, #tpu.memory_space<vmem>>, vector<2x2560xf32>
    tpu.vector_store %arg2[%c0_40, %c0_41], %91 {strides = array<i32>} : memref<2x2560xf32, #tpu.memory_space<vmem>>, vector<2x2560xf32>,
    return
  }
  func.func @transform_0(%arg0: i32) -> (i32, i32) {
    %c0_i32 = arith.constant 0 : i32
    %c1_i32 = arith.constant 1 : i32
    %c0_i32_0 = arith.constant 0 : i32
    return %c0_i32, %c1_i32 : i32, i32
  }
  func.func @transform_1(%arg0: i32) -> (i32, i32) {
    %c0_i32 = arith.constant 0 : i32
    %c0_i32_0 = arith.constant 0 : i32
    %c0_i32_1 = arith.constant 0 : i32
    return %c0_i32, %c0_i32_0 : i32, i32
  }
}

</mosaic_0001>

<llo_original>
// kernel: perfect_model_forward.1
$region0: #{perfect_model_forward.1}
  #allocation0 [shape = 'u32[]', space=smem, size = 0x4, offset = 0x4, fixed_abs, tag = 'smem constant byte address 0x4 - core index']
  #allocation1 [shape = 'u32[72,128]{1,0:T(1,128)}', space=vmem, size = 0x9000, scoped, tag = 'internal scratch']
  %s0 = inlined_call_operand.vmem [shape: f32[2,1024], index: 0, kind: input, shape index: {}]
  %s1 = inlined_call_operand.vmem [shape: f32[2,2560], index: 1, kind: output, shape index: {}]
  %s2 = sld [smem:[#allocation0]]
  $region14: #{perfect_model_forward.1} parent=0
    _
  %s4 = ssub.s32 1, %s2
  %s5 = scalar_select 0, %s4, %s2
  // Predicated region
  $region2: #{perfect_model_forward.1} parent=0 // pred_check
    _
  $region3: #{perfect_model_forward.1} parent=0 // pred_check_branch
    %7 = sbr.rel (0) target = $region5
  $region4: #{perfect_model_forward.1} parent=0 // pred_region
    %s8 = scalar_lea.vmem %s0, 4
  $region5: #{perfect_model_forward.1} parent=0 // pred_fallthru
    _
  %s9 = scalar_lea.vmem %s0, 4
  %s10 = scalar_lea.vmem %s0, 4
  %v11 = vld [vmem:[%s10] sm:$0xf]
  %vm12 = vcmp.lt.f32.partialorder %v11, 0.5
  %v13 = vmul.f32 %v11, 2.0
  %v14 = vsub.f32 2.0, %v13
  %v15 = vsel %vm12, %v13, %v14
  %vm16 = vcmp.lt.f32.partialorder %v15, 0.5
  %v17 = vmul.f32 %v15, 2.0
  %v18 = vsub.f32 2.0, %v17
  %v19 = vsel %vm16, %v17, %v18
  %vm20 = vcmp.lt.f32.partialorder %v19, 0.5
  %v21 = vmul.f32 %v19, 2.0
  %v22 = vsub.f32 2.0, %v21
  %v23 = vsel %vm20, %v21, %v22
  %vm24 = vcmp.lt.f32.partialorder %v23, 0.5
  %v25 = vmul.f32 %v23, 2.0
  %v26 = vsub.f32 2.0, %v25
  %v27 = vsel %vm24, %v25, %v26
  %vm28 = vcmp.lt.f32.partialorder %v27, 0.5
  %v29 = vmul.f32 %v27, 2.0
  %v30 = vsub.f32 2.0, %v29
  %v31 = vsel %vm28, %v29, %v30
  %vm32 = vcmp.lt.f32.partialorder %v31, 0.5
  %v33 = vmul.f32 %v31, 2.0
  %v34 = vsub.f32 2.0, %v33
  %v35 = vsel %vm32, %v33, %v34
  %vm36 = vcmp.lt.f32.partialorder %v35, 0.5
  %v37 = vmul.f32 %v35, 2.0
  %v38 = vsub.f32 2.0, %v37
  %v39 = vsel %vm36, %v37, %v38
  %vm40 = vcmp.lt.f32.partialorder %v39, 0.5
  %v41 = vmul.f32 %v39, 2.0
  %v42 = vsub.f32 2.0, %v41
  %v43 = vsel %vm40, %v41, %v42
  %vm44 = vcmp.lt.f32.partialorder %v43, 0.5
  %v45 = vmul.f32 %v43, 2.0
  %v46 = vsub.f32 2.0, %v45
  %v47 = vsel %vm44, %v45, %v46
  %vm48 = vcmp.lt.f32.partialorder %v47, 0.5
  %v49 = vmul.f32 %v47, 2.0
  %v50 = vsub.f32 2.0, %v49
  %v51 = vsel %vm48, %v49, %v50
  %53 = vst [vmem:[#allocation1] ss:$4 sm:$0xff] %v15
  %v54 = vld.sshfl [vmem:[#allocation1] sm:$0xff pattern:$0x73625140]
  %v55 = vld.sshfl [vmem:[#allocation1 + $0x8] sm:$0xff pattern:$0x73625140]
  %57 = vst [vmem:[#allocation1] ss:$4 sm:$0xff] %v19
  %v58 = vld.sshfl [vmem:[#allocation1] sm:$0xff pattern:$0x73625140]
  %v59 = vld.sshfl [vmem:[#allocation1 + $0x8] sm:$0xff pattern:$0x73625140]
  %61 = vst [vmem:[#allocation1] ss:$4 sm:$0xff] %v23
  %v62 = vld.sshfl [vmem:[#allocation1] sm:$0xff pattern:$0x73625140]
  %v63 = vld.sshfl [vmem:[#allocation1 + $0x8] sm:$0xff pattern:$0x73625140]
  %65 = vst [vmem:[#allocation1] ss:$4 sm:$0xff] %v27
  %v66 = vld.sshfl [vmem:[#allocation1] sm:$0xff pattern:$0x73625140]
  %v67 = vld.sshfl [vmem:[#allocation1 + $0x8] sm:$0xff pattern:$0x73625140]
  %69 = vst [vmem:[#allocation1] ss:$4 sm:$0xff] %v31
  %v70 = vld.sshfl [vmem:[#allocation1] sm:$0xff pattern:$0x73625140]
  %v71 = vld.sshfl [vmem:[#allocation1 + $0x8] sm:$0xff pattern:$0x73625140]
  %73 = vst [vmem:[#allocation1] ss:$4 sm:$0xff] %v35
  %v74 = vld.sshfl [vmem:[#allocation1] sm:$0xff pattern:$0x73625140]
  %v75 = vld.sshfl [vmem:[#allocation1 + $0x8] sm:$0xff pattern:$0x73625140]
  %77 = vst [vmem:[#allocation1] ss:$4 sm:$0xff] %v39
  %v78 = vld.sshfl [vmem:[#allocation1] sm:$0xff pattern:$0x73625140]
  %v79 = vld.sshfl [vmem:[#allocation1 + $0x8] sm:$0xff pattern:$0x73625140]
  %81 = vst [vmem:[#allocation1] ss:$4 sm:$0xff] %v43
  %v82 = vld.sshfl [vmem:[#allocation1] sm:$0xff pattern:$0x73625140]
  %v83 = vld.sshfl [vmem:[#allocation1 + $0x8] sm:$0xff pattern:$0x73625140]
  %85 = vst [vmem:[#allocation1] ss:$4 sm:$0xff] %v47
  %v86 = vld.sshfl [vmem:[#allocation1] sm:$0xff pattern:$0x73625140]
  %v87 = vld.sshfl [vmem:[#allocation1 + $0x8] sm:$0xff pattern:$0x73625140]
  %89 = vst [vmem:[#allocation1] ss:$4 sm:$0xff] %v51
  %v90 = vld.sshfl [vmem:[#allocation1] sm:$0xff pattern:$0x73625140]
  %v91 = vld.sshfl [vmem:[#allocation1 + $0x8] sm:$0xff pattern:$0x73625140]
  %v92 = vrot.slane %v55, 6
  %v93 = vrot.slane %v58, 4
  %v94 = vrot.slane %v59, 2
  %v95 = vrot.slane %v63, 6
  %v96 = vrot.slane %v66, 4
  %v97 = vrot.slane %v67, 2
  %v98 = vrot.slane %v71, 6
  %v99 = vrot.slane %v74, 4
  %v100 = vrot.slane %v75, 2
  %v101 = vrot.slane %v79, 6
  %v102 = vrot.slane %v82, 4
  %v103 = vrot.slane %v83, 2
  %v104 = vrot.slane %v87, 6
  %v105 = vrot.slane %v90, 4
  %v106 = vrot.slane %v91, 2
  %vm107 = vcmask 1041408
  %v108 = vsel %vm107, %v54, %v92
  %vm109 = vcmask 1045508
  %v110 = vsel %vm109, %v93, %v94
  %vm111 = vcmask 1043456
  %v112 = vsel %vm111, %v108, %v110
  %v113 = vsel %vm107, %v62, %v95
  %v114 = vsel %vm109, %v96, %v97
  %v115 = vsel %vm111, %v113, %v114
  %v116 = vsel %vm107, %v70, %v98
  %v117 = vsel %vm109, %v99, %v100
  %v118 = vsel %vm111, %v116, %v117
  %v119 = vsel %vm107, %v78, %v101
  %v120 = vsel %vm109, %v102, %v103
  %v121 = vsel %vm111, %v119, %v120
  %v122 = vsel %vm107, %v86, %v104
  %v123 = vsel %vm109, %v105, %v106
  %v124 = vsel %vm111, %v122, %v123
  %130 = vst [vmem:[%s1] sm:$0xff] %v112
  %131 = vst [vmem:[%s1 + $0x8] sm:$0xff] %v115
  %132 = vst [vmem:[%s1 + $0x10] sm:$0xff] %v118
  %133 = vst [vmem:[%s1 + $0x18] sm:$0xff] %v121
  %134 = vst [vmem:[%s1 + $0x20] sm:$0xff] %v124
  // Predicated region
  $region6: #{perfect_model_forward.1} parent=0 // pred_check
    _
  $region7: #{perfect_model_forward.1} parent=0 // pred_check_branch
    %136 = sbr.rel (0) target = $region9
  $region8: #{perfect_model_forward.1} parent=0 // pred_region
    _
  $region9: #{perfect_model_forward.1} parent=0 // pred_fallthru
    _
  // Predicated region
  $region10: #{perfect_model_forward.1} parent=0 // pred_check
    _
  $region11: #{perfect_model_forward.1} parent=0 // pred_check_branch
    %138 = sbr.rel (0) target = $region13
  $region12: #{perfect_model_forward.1} parent=0 // pred_region
    _
  $region13: #{perfect_model_forward.1} parent=0 // pred_fallthru
    _

</llo_original>
